<compile_context>
chip_gen: v5e
topology: v5e:2x2
jax: 0.10.0
libtpu: 0.0.40
codegen_flags: <defaults>
</compile_context>

<pallas_src>
import functools

import jax
import jax.numpy as jnp
from jax.experimental import pallas as pl
from jax.experimental.pallas import tpu as pltpu

HIDDEN = 256     # hidden width of l1/l2 (fixed by the PyTorch module)
OUT_PAD = 128    # lane-dense padded output width (action_dim <= OUT_PAD)


def _actor_kernel(x_ref, w_ref, b_ref, out_ref, *, max_action, state_dim):
    # x: (B, state_dim) f32  -> cast to bf16 in-kernel (free VPU slot).
    x = x_ref[...].astype(jnp.bfloat16)

    # Layer 1: only the first `state_dim` rows of slab[0] are real weights.
    h = jnp.dot(x, w_ref[0, :state_dim, :],
                preferred_element_type=jnp.float32) + b_ref[0:1, :]
    h = jnp.maximum(h, 0.0)

    # Layer 2: full 256x256.
    h = jnp.dot(h.astype(jnp.bfloat16), w_ref[1],
                preferred_element_type=jnp.float32) + b_ref[1:2, :]
    h = jnp.maximum(h, 0.0)

    # Layer 3: first OUT_PAD columns of slab[2] (zero-padded past action_dim),
    # lane-dense (batch, 128) output tile.
    a = jnp.dot(h.astype(jnp.bfloat16), w_ref[2, :, :OUT_PAD],
                preferred_element_type=jnp.float32) + b_ref[2:3, :OUT_PAD]

    # tanh lowers to the EUP (free slot); keep all elementwise math in f32.
    out_ref[...] = (max_action * jnp.tanh(a)).astype(out_ref.dtype)


def actor_forward(state, params, max_action):
    """Pallas equivalent of Actor.forward(state) -> action, shape (batch, action_dim)."""
    batch, state_dim = state.shape
    action_dim = params["action_dim"]
    assert state_dim == params["state_dim"]
    assert action_dim <= OUT_PAD

    vmem = pl.BlockSpec(memory_space=pltpu.MemorySpace.VMEM)
    out_pad = pl.pallas_call(
        functools.partial(_actor_kernel,
                          max_action=float(max_action),
                          state_dim=state_dim),
        out_shape=jax.ShapeDtypeStruct((batch, OUT_PAD), jnp.float32),
        in_specs=[vmem, vmem, vmem],
        out_specs=vmem,
    )(state, params["w"], params["b"])

    # Padded output lanes are exactly zero (zero weights/bias -> tanh(0) = 0).
    return out_pad[:, :action_dim]


def init_params(key, state_dim, action_dim, hidden=HIDDEN):
    """PyTorch-style init: U(-1/sqrt(fan_in), 1/sqrt(fan_in)) per layer.

    Weights are packed transposed ([in, out]) into one zero-padded bf16 slab of
    shape (3, hidden, hidden); biases into one f32 slab of shape (3, hidden).
    NOTE: bf16 weights diverge slightly from an f32 PyTorch Actor; keep an f32
    path if exact parity is required."""
    assert hidden == HIDDEN and action_dim <= OUT_PAD and state_dim <= hidden

    layers = [
        (state_dim, hidden),   # l1
        (hidden, hidden),      # l2
        (hidden, action_dim),  # l3
    ]
    w_slab = jnp.zeros((3, hidden, hidden), jnp.float32)
    b_slab = jnp.zeros((3, hidden), jnp.float32)

    keys = jax.random.split(key, 2 * len(layers))
    for i, (fan_in, fan_out) in enumerate(layers):
        bound = 1.0 / (float(fan_in) ** 0.5)
        w = jax.random.uniform(keys[2 * i], (fan_in, fan_out), jnp.float32,
                               -bound, bound)
        b = jax.random.uniform(keys[2 * i + 1], (fan_out,), jnp.float32,
                               -bound, bound)
        w_slab = w_slab.at[i, :fan_in, :fan_out].set(w)
        b_slab = b_slab.at[i, :fan_out].set(b)

    return {
        "w": w_slab.astype(jnp.bfloat16),   # (3, 256, 256) bf16
        "b": b_slab,                        # (3, 256) f32
        "state_dim": state_dim,
        "action_dim": action_dim,
    }


def actor_reference(state, params, max_action):
    """Pure-JAX reference with the same bf16 weights / f32 accumulation."""
    sd = params["state_dim"]
    ad = params["action_dim"]
    w1 = params["w"][0, :sd, :]
    w2 = params["w"][1]
    w3 = params["w"][2, :, :ad]
    b1 = params["b"][0]
    b2 = params["b"][1]
    b3 = params["b"][2, :ad]

    x = state.astype(jnp.bfloat16)
    h = jax.nn.relu(jnp.dot(x, w1, preferred_element_type=jnp.float32) + b1)
    h = jax.nn.relu(jnp.dot(h.astype(jnp.bfloat16), w2,
                            preferred_element_type=jnp.float32) + b2)
    a = jnp.dot(h.astype(jnp.bfloat16), w3,
                preferred_element_type=jnp.float32) + b3
    return max_action * jnp.tanh(a)


if __name__ == "__main__":
    key = jax.random.PRNGKey(0)
    k_params, k_state = jax.random.split(key, 2)

    batch = 8
    state_dim = 24
    action_dim = 8
    max_action = 2.0

    params = init_params(k_params, state_dim, action_dim)
    state = jax.random.normal(k_state, (batch, state_dim), jnp.float32)

    act = actor_forward(state, params, max_action)
    jax.block_until_ready(act)

    act_ref = actor_reference(state, params, max_action)
    assert act.shape == (batch, action_dim)
    assert bool(jnp.all(jnp.abs(act) <= max_action + 1e-4))
    assert jnp.allclose(act, act_ref, atol=1e-2, rtol=1e-2)

    print("KERNEL_OK")
</pallas_src>

<mosaic_0001>
module attributes {stable_mosaic.version = 11 : i64} {
  func.func @_actor_kernel(%arg0: memref<8x24xf32, #tpu.memory_space<vmem>>, %arg1: memref<3x256x256xbf16, #tpu.memory_space<vmem>>, %arg2: memref<3x256xf32, #tpu.memory_space<vmem>>, %arg3: memref<8x128xf32, #tpu.memory_space<vmem>>) attributes {dimension_semantics = [], scalar_prefetch = 0 : i64, scratch_operands = 0 : i64, tpu.core_type = #tpu.core_type<tc>} {
    %c0 = arith.constant 0 : index
    %c0_0 = arith.constant 0 : index
    %0 = vector.load %arg0[%c0, %c0_0] : memref<8x24xf32, #tpu.memory_space<vmem>>, vector<8x24xf32>
    %1 = arith.truncf %0 : vector<8x24xf32> to vector<8x24xbf16>
    %c0_1 = arith.constant 0 : index
    %c0_2 = arith.constant 0 : index
    %c0_3 = arith.constant 0 : index
    %2 = vector.load %arg1[%c0_1, %c0_2, %c0_3] : memref<3x256x256xbf16, #tpu.memory_space<vmem>>, vector<1x24x256xbf16>
    %3 = vector.shape_cast %2 : vector<1x24x256xbf16> to vector<24x256xbf16>
    %cst = arith.constant dense<0.000000e+00> : vector<8x256xf32>
    %4 = tpu.matmul %1, %3, %cst {dimension_numbers = #tpu.dot_dimension_numbers<[1], [0], [0], [1], [0, 0, 1, 1], [], []>} : vector<8x24xbf16>, vector<24x256xbf16>, vector<8x256xf32> -> vector<8x256xf32>
    %c0_4 = arith.constant 0 : index
    %c0_5 = arith.constant 0 : index
    %5 = vector.load %arg2[%c0_4, %c0_5] : memref<3x256xf32, #tpu.memory_space<vmem>>, vector<1x256xf32>
    %6 = vector.broadcast %5 : vector<1x256xf32> to vector<8x256xf32>
    %7 = arith.addf %4, %6 : vector<8x256xf32>
    %cst_6 = arith.constant 0.000000e+00 : f32
    %8 = vector.broadcast %cst_6 : f32 to vector<8x256xf32>
    %9 = arith.maximumf %7, %8 : vector<8x256xf32>
    %10 = arith.truncf %9 : vector<8x256xf32> to vector<8x256xbf16>
    %c1 = arith.constant 1 : index
    %c0_7 = arith.constant 0 : index
    %c0_8 = arith.constant 0 : index
    %11 = vector.load %arg1[%c1, %c0_7, %c0_8] : memref<3x256x256xbf16, #tpu.memory_space<vmem>>, vector<1x256x256xbf16>
    %12 = vector.shape_cast %11 : vector<1x256x256xbf16> to vector<256x256xbf16>
    %cst_9 = arith.constant dense<0.000000e+00> : vector<8x256xf32>
    %13 = tpu.matmul %10, %12, %cst_9 {dimension_numbers = #tpu.dot_dimension_numbers<[1], [0], [0], [1], [0, 0, 1, 1], [], []>} : vector<8x256xbf16>, vector<256x256xbf16>, vector<8x256xf32> -> vector<8x256xf32>
    %c1_10 = arith.constant 1 : index
    %c0_11 = arith.constant 0 : index
    %14 = vector.load %arg2[%c1_10, %c0_11] : memref<3x256xf32, #tpu.memory_space<vmem>>, vector<1x256xf32>
    %15 = vector.broadcast %14 : vector<1x256xf32> to vector<8x256xf32>
    %16 = arith.addf %13, %15 : vector<8x256xf32>
    %cst_12 = arith.constant 0.000000e+00 : f32
    %17 = vector.broadcast %cst_12 : f32 to vector<8x256xf32>
    %18 = arith.maximumf %16, %17 : vector<8x256xf32>
    %19 = arith.truncf %18 : vector<8x256xf32> to vector<8x256xbf16>
    %c2 = arith.constant 2 : index
    %c0_13 = arith.constant 0 : index
    %c0_14 = arith.constant 0 : index
    %20 = vector.load %arg1[%c2, %c0_13, %c0_14] : memref<3x256x256xbf16, #tpu.memory_space<vmem>>, vector<1x256x128xbf16>
    %21 = vector.shape_cast %20 : vector<1x256x128xbf16> to vector<256x128xbf16>
    %cst_15 = arith.constant dense<0.000000e+00> : vector<8x128xf32>
    %22 = tpu.matmul %19, %21, %cst_15 {dimension_numbers = #tpu.dot_dimension_numbers<[1], [0], [0], [1], [0, 0, 1, 1], [], []>} : vector<8x256xbf16>, vector<256x128xbf16>, vector<8x128xf32> -> vector<8x128xf32>
    %c2_16 = arith.constant 2 : index
    %c0_17 = arith.constant 0 : index
    %23 = vector.load %arg2[%c2_16, %c0_17] : memref<3x256xf32, #tpu.memory_space<vmem>>, vector<1x128xf32>
    %24 = vector.broadcast %23 : vector<1x128xf32> to vector<8x128xf32>
    %25 = arith.addf %22, %24 : vector<8x128xf32>
    %26 = math.tanh %25 : vector<8x128xf32>
    %cst_18 = arith.constant 2.000000e+00 : f32
    %27 = vector.broadcast %cst_18 : f32 to vector<8x128xf32>
    %28 = arith.mulf %27, %26 : vector<8x128xf32>
    %c0_19 = arith.constant 0 : index
    %c0_20 = arith.constant 0 : index
    %29 = vector.load %arg3[%c0_19, %c0_20] : memref<8x128xf32, #tpu.memory_space<vmem>>, vector<8x128xf32>
    tpu.vector_store %arg3[%c0_19, %c0_20], %28 {strides = array<i32>} : memref<8x128xf32, #tpu.memory_space<vmem>>, vector<8x128xf32>,
    return
  }
}

</mosaic_0001>

<llo_original>
// kernel: tpu_custom_call.1
$region0: #{tpu_custom_call.1}
  #allocation0 [shape = 'u32[]', space=smem, size = 0x4, offset = 0x4, fixed_abs, tag = 'smem constant byte address 0x4 - core index']
  #allocation1 [shape = 'u32[72,128]{1,0:T(1,128)}', space=vmem, size = 0x9000, scoped, tag = 'internal scratch']
  %s0 = inlined_call_operand.hbm [shape: f32[8,24], index: 0, kind: input, shape index: {}]
  %s1 = inlined_call_operand.hbm [shape: bf16[3,256,256], index: 1, kind: input, shape index: {}]
  %s2 = inlined_call_operand.hbm [shape: f32[3,256], index: 2, kind: input, shape index: {}]
  %s3 = inlined_call_operand.hbm [shape: f32[8,128], index: 3, kind: output, shape index: {}]
  %s4 = sld [smem:[#allocation0]]
  $region34: #{tpu_custom_call.1} parent=0
    _
  %s6 = ssub.s32 1, %s4
  %s7 = scalar_select 0, %s6, %s4
  $region1: #{tpu_custom_call.1} parent=0
    #allocation2 [shape = 'u8[4096]{0}', space=vmem, size = 0x1000, scoped, tag = 'input window, operand 0, single buffered']
    #allocation3 [shape = 's32[1]{0}', space=sflag, size = 0x4, scoped, tag = 'scoped memory for tpu_custom_call.1']
    #allocation4 [shape = 's32[1]{0}', space=sflag, size = 0x4, scoped, tag = 'scoped memory for tpu_custom_call.1']
    #allocation5 [shape = 'u8[393216]{0}', space=vmem, size = 0x60000, scoped, tag = 'input window, operand 1, single buffered']
    #allocation6 [shape = 's32[1]{0}', space=sflag, size = 0x4, scoped, tag = 'scoped memory for tpu_custom_call.1']
    #allocation7 [shape = 'u8[4096]{0}', space=vmem, size = 0x1000, scoped, tag = 'input window, operand 2, single buffered']
    #allocation8 [shape = 'u8[4096]{0}', space=vmem, size = 0x1000, scoped, tag = 'output window, operand 0, single buffered']
    %8 = vsyncpa [#allocation3], 0
    %9 = vsyncpa [#allocation6], 0
    %10 = vsyncpa [#allocation4], 0
    // Predicated region
    $region2: #{tpu_custom_call.1} parent=1 // pred_check
      _
    $region3: #{tpu_custom_call.1} parent=1 // pred_check_branch
      %12 = sbr.rel (0) target = $region5
    $region4: #{tpu_custom_call.1} parent=1 // pred_region
      %14 = vsyncadd [#allocation3], 0
      %s16 = sshll.u32 %s0, 4
      %s17 = int_to_ptr.hbm [resolvable:$true] %s16
      %s18 = sshll.u32 [#allocation2], 4
      %s19 = int_to_ptr.vmem [resolvable:$true] %s18
      %21 = dma.hbm_to_vmem [thread:$0]  %s17, 128, %s19, [#allocation3]
    $region5: #{tpu_custom_call.1} parent=1 // pred_fallthru
      _
    // Predicated region
    $region6: #{tpu_custom_call.1} parent=1 // pred_check
      _
    $region7: #{tpu_custom_call.1} parent=1 // pred_check_branch
      %23 = sbr.rel (0) target = $region9
    $region8: #{tpu_custom_call.1} parent=1 // pred_region
      %25 = vsyncadd [#allocation6], 0
      %s26 = sshll.u32 %s1, 4
      %s27 = int_to_ptr.hbm [resolvable:$true] %s26
      %s28 = sshll.u32 [#allocation5], 4
      %s29 = int_to_ptr.vmem [resolvable:$true] %s28
      %34 = dma.hbm_to_vmem [thread:$0]  %s27, 12288, %s29, [#allocation6], 128, 128, 8
    $region9: #{tpu_custom_call.1} parent=1 // pred_fallthru
      _
    // Predicated region
    $region10: #{tpu_custom_call.1} parent=1 // pred_check
      _
    $region11: #{tpu_custom_call.1} parent=1 // pred_check_branch
      %36 = sbr.rel (0) target = $region13
    $region12: #{tpu_custom_call.1} parent=1 // pred_region
      %38 = vsyncadd [#allocation6], 0
      %s40 = sshll.u32 %s2, 4
      %s41 = int_to_ptr.hbm [resolvable:$true] %s40
      %s42 = sshll.u32 [#allocation7], 4
      %s43 = int_to_ptr.vmem [resolvable:$true] %s42
      %45 = dma.hbm_to_vmem [thread:$0]  %s41, 128, %s43, [#allocation6]
    $region13: #{tpu_custom_call.1} parent=1 // pred_fallthru
      _
    // Predicated region
    $region14: #{tpu_custom_call.1} parent=1 // pred_check
      _
    $region15: #{tpu_custom_call.1} parent=1 // pred_check_branch
      %47 = sbr.rel (0) target = $region17
    $region16: #{tpu_custom_call.1} parent=1 // pred_region
      %49 = dma.done [#allocation3], 128
    $region17: #{tpu_custom_call.1} parent=1 // pred_fallthru
      _
    // Predicated region
    $region18: #{tpu_custom_call.1} parent=1 // pred_check
      _
    $region19: #{tpu_custom_call.1} parent=1 // pred_check_branch
      %51 = sbr.rel (0) target = $region21
    $region20: #{tpu_custom_call.1} parent=1 // pred_region
      %53 = dma.done [#allocation6], 12288
    $region21: #{tpu_custom_call.1} parent=1 // pred_fallthru
      _
    // Predicated region
    $region22: #{tpu_custom_call.1} parent=1 // pred_check
      _
    $region23: #{tpu_custom_call.1} parent=1 // pred_check_branch
      %55 = sbr.rel (0) target = $region25
    $region24: #{tpu_custom_call.1} parent=1 // pred_region
      %57 = dma.done [#allocation6], 128
    $region25: #{tpu_custom_call.1} parent=1 // pred_fallthru
      _
    %v59 = vld [vmem:[#allocation2] sm:$0xff]
    %v60 = vpack.c.bf16 %v59, %v59
    %v61 = vld [vmem:[#allocation5] sm:$0xff]
    %v62 = vld [vmem:[#allocation5 + $0x8] sm:$0xff]
    %v63 = vld [vmem:[#allocation5 + $0x10] sm:$0xff]
    %v64 = vld [vmem:[#allocation7] ss:$4 sm:$0x3]
    %v66 = vperm.slane %v64, 0
    %v67 = vperm.slane %v64, 1
    %v73 = vunpack.c.l.b16 %v61
    %v74 = vunpack.c.h.b16 %v61
    %v75 = vunpack.c.l.b16 %v62
    %v76 = vunpack.c.h.b16 %v62
    %v77 = vunpack.c.l.b16 %v63
    %v78 = vunpack.c.h.b16 %v63
    %v79 = vpack.c.b16 %v75, %v73
    %v80 = vpack.c.b16 %v76, %v74
    %v81 = vpack.c.b16 %v77, %v77
    %v82 = vpack.c.b16 %v78, %v78
    %vm85 = vcmask 195584
    %v87 = vsel %vm85, %v60, 0
    %vm89 = vcmask 1043456
    %v91 = vsel %vm89, %v81, 0
    %v94 = vsel %vm89, %v82, 0
    %96 = vmatpush.bf16.msra.mxu0 0
    %97 = vmatpush.bf16.msra.mxu0 0
    %98 = vmatpush.bf16.msra.mxu0 0
    %99 = vmatpush.bf16.msra.mxu0 0
    %100 = vmatpush.bf16.msra.mxu0 0
    %101 = vmatpush.bf16.msra.mxu0 0
    %102 = vmatpush.bf16.msra.mxu0 %v91
    %103 = vmatpush.bf16.msra.mxu0 %v79
    %104 = vmatmul.bf16.gmra.mxu0 %v87
    %v105 = vpop.f32.mrf.mxu0
    %v106 = vadd.f32 %v66, %v105
    %v107 = vpop.f32.mrf.mxu0
    %108 = vdwg.mxu0
    %109 = vmatpush.bf16.msra.mxu0 0
    %110 = vmatpush.bf16.msra.mxu0 0
    %111 = vmatpush.bf16.msra.mxu0 0
    %112 = vmatpush.bf16.msra.mxu0 0
    %113 = vmatpush.bf16.msra.mxu0 0
    %114 = vmatpush.bf16.msra.mxu0 0
    %115 = vmatpush.bf16.msra.mxu0 %v94
    %116 = vmatpush.bf16.msra.mxu0 %v80
    %117 = vmatmul.bf16.gmra.mxu0 %v87
    %v118 = vpop.f32.mrf.mxu0
    %v119 = vadd.f32 %v67, %v118
    %v120 = vpop.f32.mrf.mxu0
    %121 = vdwg.mxu0
    %v122 = vmax.f32 %v106, 0.0
    %v123 = vmax.f32 %v119, 0.0
    %v124 = vpack.c.bf16 %v122, %v122
    %v125 = vpack.c.bf16 %v123, %v123
    %s126 = scalar_lea.vmem [#allocation5], 256
    %v127 = vld [vmem:[%s126] sm:$0xff]
    %v128 = vld [vmem:[%s126 + $0x8] sm:$0xff]
    %v129 = vld [vmem:[%s126 + $0x10] sm:$0xff]
    %v130 = vld [vmem:[%s126 + $0x18] sm:$0xff]
    %v131 = vld [vmem:[%s126 + $0x20] sm:$0xff]
    %v132 = vld [vmem:[%s126 + $0x28] sm:$0xff]
    %v133 = vld [vmem:[%s126 + $0x30] sm:$0xff]
    %v134 = vld [vmem:[%s126 + $0x38] sm:$0xff]
    %v135 = vld [vmem:[%s126 + $0x40] sm:$0xff]
    %v136 = vld [vmem:[%s126 + $0x48] sm:$0xff]
    %v137 = vld [vmem:[%s126 + $0x50] sm:$0xff]
    %v138 = vld [vmem:[%s126 + $0x58] sm:$0xff]
    %v139 = vld [vmem:[%s126 + $0x60] sm:$0xff]
    %v140 = vld [vmem:[%s126 + $0x68] sm:$0xff]
    %v141 = vld [vmem:[%s126 + $0x70] sm:$0xff]
    %v142 = vld [vmem:[%s126 + $0x78] sm:$0xff]
    %v143 = vld [vmem:[%s126 + $0x80] sm:$0xff]
    %v144 = vld [vmem:[%s126 + $0x88] sm:$0xff]
    %v145 = vld [vmem:[%s126 + $0x90] sm:$0xff]
    %v146 = vld [vmem:[%s126 + $0x98] sm:$0xff]
    %v147 = vld [vmem:[%s126 + $0xa0] sm:$0xff]
    %v148 = vld [vmem:[%s126 + $0xa8] sm:$0xff]
    %v149 = vld [vmem:[%s126 + $0xb0] sm:$0xff]
    %v150 = vld [vmem:[%s126 + $0xb8] sm:$0xff]
    %v151 = vld [vmem:[%s126 + $0xc0] sm:$0xff]
    %v152 = vld [vmem:[%s126 + $0xc8] sm:$0xff]
    %v153 = vld [vmem:[%s126 + $0xd0] sm:$0xff]
    %v154 = vld [vmem:[%s126 + $0xd8] sm:$0xff]
    %v155 = vld [vmem:[%s126 + $0xe0] sm:$0xff]
    %v156 = vld [vmem:[%s126 + $0xe8] sm:$0xff]
    %v157 = vld [vmem:[%s126 + $0xf0] sm:$0xff]
    %v158 = vld [vmem:[%s126 + $0xf8] sm:$0xff]
    %s159 = scalar_lea.vmem [#allocation7], 1
    %v160 = vld [vmem:[%s159] ss:$4 sm:$0x3]
    %v162 = vperm.slane %v160, 0
    %v163 = vperm.slane %v160, 1
    %v198 = vunpack.c.l.b16 %v127
    %v199 = vunpack.c.h.b16 %v127
    %v200 = vunpack.c.l.b16 %v128
    %v201 = vunpack.c.h.b16 %v128
    %v202 = vunpack.c.l.b16 %v129
    %v203 = vunpack.c.h.b16 %v129
    %v204 = vunpack.c.l.b16 %v130
    %v205 = vunpack.c.h.b16 %v130
    %v206 = vunpack.c.l.b16 %v131
    %v207 = vunpack.c.h.b16 %v131
    %v208 = vunpack.c.l.b16 %v132
    %v209 = vunpack.c.h.b16 %v132
    %v210 = vunpack.c.l.b16 %v133
    %v211 = vunpack.c.h.b16 %v133
    %v212 = vunpack.c.l.b16 %v134
    %v213 = vunpack.c.h.b16 %v134
    %v214 = vunpack.c.l.b16 %v135
    %v215 = vunpack.c.h.b16 %v135
    %v216 = vunpack.c.l.b16 %v136
    %v217 = vunpack.c.h.b16 %v136
    %v218 = vunpack.c.l.b16 %v137
    %v219 = vunpack.c.h.b16 %v137
    %v220 = vunpack.c.l.b16 %v138
    %v221 = vunpack.c.h.b16 %v138
    %v222 = vunpack.c.l.b16 %v139
    %v223 = vunpack.c.h.b16 %v139
    %v224 = vunpack.c.l.b16 %v140
    %v225 = vunpack.c.h.b16 %v140
    %v226 = vunpack.c.l.b16 %v141
    %v227 = vunpack.c.h.b16 %v141
    %v228 = vunpack.c.l.b16 %v142
    %v229 = vunpack.c.h.b16 %v142
    %v230 = vunpack.c.l.b16 %v143
    %v231 = vunpack.c.h.b16 %v143
    %v232 = vunpack.c.l.b16 %v144
    %v233 = vunpack.c.h.b16 %v144
    %v234 = vunpack.c.l.b16 %v145
    %v235 = vunpack.c.h.b16 %v145
    %v236 = vunpack.c.l.b16 %v146
    %v237 = vunpack.c.h.b16 %v146
    %v238 = vunpack.c.l.b16 %v147
    %v239 = vunpack.c.h.b16 %v147
    %v240 = vunpack.c.l.b16 %v148
    %v241 = vunpack.c.h.b16 %v148
    %v242 = vunpack.c.l.b16 %v149
    %v243 = vunpack.c.h.b16 %v149
    %v244 = vunpack.c.l.b16 %v150
    %v245 = vunpack.c.h.b16 %v150
    %v246 = vunpack.c.l.b16 %v151
    %v247 = vunpack.c.h.b16 %v151
    %v248 = vunpack.c.l.b16 %v152
    %v249 = vunpack.c.h.b16 %v152
    %v250 = vunpack.c.l.b16 %v153
    %v251 = vunpack.c.h.b16 %v153
    %v252 = vunpack.c.l.b16 %v154
    %v253 = vunpack.c.h.b16 %v154
    %v254 = vunpack.c.l.b16 %v155
    %v255 = vunpack.c.h.b16 %v155
    %v256 = vunpack.c.l.b16 %v156
    %v257 = vunpack.c.h.b16 %v156
    %v258 = vunpack.c.l.b16 %v157
    %v259 = vunpack.c.h.b16 %v157
    %v260 = vunpack.c.l.b16 %v158
    %v261 = vunpack.c.h.b16 %v158
    %v262 = vpack.c.b16 %v200, %v198
    %v263 = vpack.c.b16 %v201, %v199
    %v264 = vpack.c.b16 %v204, %v202
    %v265 = vpack.c.b16 %v205, %v203
    %v266 = vpack.c.b16 %v208, %v206
    %v267 = vpack.c.b16 %v209, %v207
    %v268 = vpack.c.b16 %v212, %v210
    %v269 = vpack.c.b16 %v213, %v211
    %v270 = vpack.c.b16 %v216, %v214
    %v271 = vpack.c.b16 %v217, %v215
    %v272 = vpack.c.b16 %v220, %v218
    %v273 = vpack.c.b16 %v221, %v219
    %v274 = vpack.c.b16 %v224, %v222
    %v275 = vpack.c.b16 %v225, %v223
    %v276 = vpack.c.b16 %v228, %v226
    %v277 = vpack.c.b16 %v229, %v227
    %v278 = vpack.c.b16 %v232, %v230
    %v279 = vpack.c.b16 %v233, %v231
    %v280 = vpack.c.b16 %v236, %v234
    %v281 = vpack.c.b16 %v237, %v235
    %v282 = vpack.c.b16 %v240, %v238
    %v283 = vpack.c.b16 %v241, %v239
    %v284 = vpack.c.b16 %v244, %v242
    %v285 = vpack.c.b16 %v245, %v243
    %v286 = vpack.c.b16 %v248, %v246
    %v287 = vpack.c.b16 %v249, %v247
    %v288 = vpack.c.b16 %v252, %v250
    %v289 = vpack.c.b16 %v253, %v251
    %v290 = vpack.c.b16 %v256, %v254
    %v291 = vpack.c.b16 %v257, %v255
    %v292 = vpack.c.b16 %v260, %v258
    %v293 = vpack.c.b16 %v261, %v259
    %326 = vmatpush.bf16.msra.mxu0 %v276
    %327 = vmatpush.bf16.msra.mxu0 %v274
    %328 = vmatpush.bf16.msra.mxu0 %v272
    %329 = vmatpush.bf16.msra.mxu0 %v270
    %330 = vmatpush.bf16.msra.mxu0 %v268
    %331 = vmatpush.bf16.msra.mxu0 %v266
    %332 = vmatpush.bf16.msra.mxu0 %v264
    %333 = vmatpush.bf16.msra.mxu0 %v262
    %334 = vmatmul.bf16.gmra.mxu0 %v124
    %v335 = vpop.f32.mrf.mxu0
    %v336 = vadd.f32 %v162, %v335
    %v337 = vpop.f32.mrf.mxu0
    %338 = vdwg.mxu0
    %339 = vmatpush.bf16.msra.mxu0 %v292
    %340 = vmatpush.bf16.msra.mxu0 %v290
    %341 = vmatpush.bf16.msra.mxu0 %v288
    %342 = vmatpush.bf16.msra.mxu0 %v286
    %343 = vmatpush.bf16.msra.mxu0 %v284
    %344 = vmatpush.bf16.msra.mxu0 %v282
    %345 = vmatpush.bf16.msra.mxu0 %v280
    %346 = vmatpush.bf16.msra.mxu0 %v278
    %347 = vmatmul.bf16.gmra.mxu0 %v125
    %v348 = vpop.f32.mrf.mxu0
    %v349 = vadd.f32 %v336, %v348
    %v350 = vpop.f32.mrf.mxu0
    %351 = vdwg.mxu0
    %352 = vmatpush.bf16.msra.mxu0 %v277
    %353 = vmatpush.bf16.msra.mxu0 %v275
    %354 = vmatpush.bf16.msra.mxu0 %v273
    %355 = vmatpush.bf16.msra.mxu0 %v271
    %356 = vmatpush.bf16.msra.mxu0 %v269
    %357 = vmatpush.bf16.msra.mxu0 %v267
    %358 = vmatpush.bf16.msra.mxu0 %v265
    %359 = vmatpush.bf16.msra.mxu0 %v263
    %360 = vmatmul.bf16.gmra.mxu0 %v124
    %v361 = vpop.f32.mrf.mxu0
    %v362 = vadd.f32 %v163, %v361
    %v363 = vpop.f32.mrf.mxu0
    %364 = vdwg.mxu0
    %365 = vmatpush.bf16.msra.mxu0 %v293
    %366 = vmatpush.bf16.msra.mxu0 %v291
    %367 = vmatpush.bf16.msra.mxu0 %v289
    %368 = vmatpush.bf16.msra.mxu0 %v287
    %369 = vmatpush.bf16.msra.mxu0 %v285
    %370 = vmatpush.bf16.msra.mxu0 %v283
    %371 = vmatpush.bf16.msra.mxu0 %v281
    %372 = vmatpush.bf16.msra.mxu0 %v279
    %373 = vmatmul.bf16.gmra.mxu0 %v125
    %v374 = vpop.f32.mrf.mxu0
    %v375 = vadd.f32 %v362, %v374
    %v376 = vpop.f32.mrf.mxu0
    %377 = vdwg.mxu0
    %v378 = vmax.f32 %v349, 0.0
    %v379 = vmax.f32 %v375, 0.0
    %v380 = vpack.c.bf16 %v378, %v378
    %v381 = vpack.c.bf16 %v379, %v379
    %s382 = scalar_lea.vmem [#allocation5], 512
    %v383 = vld [vmem:[%s382] sm:$0xf]
    %v384 = vld [vmem:[%s382 + $0x8] sm:$0xf]
    %v385 = vld [vmem:[%s382 + $0x10] sm:$0xf]
    %v386 = vld [vmem:[%s382 + $0x18] sm:$0xf]
    %v387 = vld [vmem:[%s382 + $0x20] sm:$0xf]
    %v388 = vld [vmem:[%s382 + $0x28] sm:$0xf]
    %v389 = vld [vmem:[%s382 + $0x30] sm:$0xf]
    %v390 = vld [vmem:[%s382 + $0x38] sm:$0xf]
    %v391 = vld [vmem:[%s382 + $0x40] sm:$0xf]
    %v392 = vld [vmem:[%s382 + $0x48] sm:$0xf]
    %v393 = vld [vmem:[%s382 + $0x50] sm:$0xf]
    %v394 = vld [vmem:[%s382 + $0x58] sm:$0xf]
    %v395 = vld [vmem:[%s382 + $0x60] sm:$0xf]
    %v396 = vld [vmem:[%s382 + $0x68] sm:$0xf]
    %v397 = vld [vmem:[%s382 + $0x70] sm:$0xf]
    %v398 = vld [vmem:[%s382 + $0x78] sm:$0xf]
    %v399 = vld [vmem:[%s382 + $0x80] sm:$0xf]
    %v400 = vld [vmem:[%s382 + $0x88] sm:$0xf]
    %v401 = vld [vmem:[%s382 + $0x90] sm:$0xf]
    %v402 = vld [vmem:[%s382 + $0x98] sm:$0xf]
    %v403 = vld [vmem:[%s382 + $0xa0] sm:$0xf]
    %v404 = vld [vmem:[%s382 + $0xa8] sm:$0xf]
    %v405 = vld [vmem:[%s382 + $0xb0] sm:$0xf]
    %v406 = vld [vmem:[%s382 + $0xb8] sm:$0xf]
    %v407 = vld [vmem:[%s382 + $0xc0] sm:$0xf]
    %v408 = vld [vmem:[%s382 + $0xc8] sm:$0xf]
    %v409 = vld [vmem:[%s382 + $0xd0] sm:$0xf]
    %v410 = vld [vmem:[%s382 + $0xd8] sm:$0xf]
    %v411 = vld [vmem:[%s382 + $0xe0] sm:$0xf]
    %v412 = vld [vmem:[%s382 + $0xe8] sm:$0xf]
    %v413 = vld [vmem:[%s382 + $0xf0] sm:$0xf]
    %v414 = vld [vmem:[%s382 + $0xf8] sm:$0xf]
    %v415 = vld [vmem:[#allocation7 + $0x2] sm:$0x1]
    %v416 = vperm.slane %v415, 0
    %v449 = vunpack.c.l.b16 %v383
    %v450 = vunpack.c.l.b16 %v384
    %v451 = vunpack.c.l.b16 %v385
    %v452 = vunpack.c.l.b16 %v386
    %v453 = vunpack.c.l.b16 %v387
    %v454 = vunpack.c.l.b16 %v388
    %v455 = vunpack.c.l.b16 %v389
    %v456 = vunpack.c.l.b16 %v390
    %v457 = vunpack.c.l.b16 %v391
    %v458 = vunpack.c.l.b16 %v392
    %v459 = vunpack.c.l.b16 %v393
    %v460 = vunpack.c.l.b16 %v394
    %v461 = vunpack.c.l.b16 %v395
    %v462 = vunpack.c.l.b16 %v396
    %v463 = vunpack.c.l.b16 %v397
    %v464 = vunpack.c.l.b16 %v398
    %v465 = vunpack.c.l.b16 %v399
    %v466 = vunpack.c.l.b16 %v400
    %v467 = vunpack.c.l.b16 %v401
    %v468 = vunpack.c.l.b16 %v402
    %v469 = vunpack.c.l.b16 %v403
    %v470 = vunpack.c.l.b16 %v404
    %v471 = vunpack.c.l.b16 %v405
    %v472 = vunpack.c.l.b16 %v406
    %v473 = vunpack.c.l.b16 %v407
    %v474 = vunpack.c.l.b16 %v408
    %v475 = vunpack.c.l.b16 %v409
    %v476 = vunpack.c.l.b16 %v410
    %v477 = vunpack.c.l.b16 %v411
    %v478 = vunpack.c.l.b16 %v412
    %v479 = vunpack.c.l.b16 %v413
    %v480 = vunpack.c.l.b16 %v414
    %v481 = vpack.c.b16 %v450, %v449
    %v482 = vpack.c.b16 %v452, %v451
    %v483 = vpack.c.b16 %v454, %v453
    %v484 = vpack.c.b16 %v456, %v455
    %v485 = vpack.c.b16 %v458, %v457
    %v486 = vpack.c.b16 %v460, %v459
    %v487 = vpack.c.b16 %v462, %v461
    %v488 = vpack.c.b16 %v464, %v463
    %v489 = vpack.c.b16 %v466, %v465
    %v490 = vpack.c.b16 %v468, %v467
    %v491 = vpack.c.b16 %v470, %v469
    %v492 = vpack.c.b16 %v472, %v471
    %v493 = vpack.c.b16 %v474, %v473
    %v494 = vpack.c.b16 %v476, %v475
    %v495 = vpack.c.b16 %v478, %v477
    %v496 = vpack.c.b16 %v480, %v479
    %513 = vmatpush.bf16.msra.mxu0 %v488
    %514 = vmatpush.bf16.msra.mxu0 %v487
    %515 = vmatpush.bf16.msra.mxu0 %v486
    %516 = vmatpush.bf16.msra.mxu0 %v485
    %517 = vmatpush.bf16.msra.mxu0 %v484
    %518 = vmatpush.bf16.msra.mxu0 %v483
    %519 = vmatpush.bf16.msra.mxu0 %v482
    %520 = vmatpush.bf16.msra.mxu0 %v481
    %521 = vmatmul.bf16.gmra.mxu0 %v380
    %v522 = vpop.f32.mrf.mxu0
    %v523 = vadd.f32 %v416, %v522
    %v524 = vpop.f32.mrf.mxu0
    %525 = vdwg.mxu0
    %526 = vmatpush.bf16.msra.mxu0 %v496
    %527 = vmatpush.bf16.msra.mxu0 %v495
    %528 = vmatpush.bf16.msra.mxu0 %v494
    %529 = vmatpush.bf16.msra.mxu0 %v493
    %530 = vmatpush.bf16.msra.mxu0 %v492
    %531 = vmatpush.bf16.msra.mxu0 %v491
    %532 = vmatpush.bf16.msra.mxu0 %v490
    %533 = vmatpush.bf16.msra.mxu0 %v489
    %534 = vmatmul.bf16.gmra.mxu0 %v381
    %v535 = vpop.f32.mrf.mxu0
    %v536 = vadd.f32 %v523, %v535
    %v537 = vpop.f32.mrf.mxu0
    %538 = vdwg.mxu0
    %v539 = vtanh.pop %v536
    %v540 = vmul.f32 %v539, 2.0
    %541 = vst [vmem:[#allocation8] sm:$0xff] %v540
    // Predicated region
    $region26: #{tpu_custom_call.1} parent=1 // pred_check
      _
    $region27: #{tpu_custom_call.1} parent=1 // pred_check_branch
      %543 = sbr.rel (0) target = $region29
    $region28: #{tpu_custom_call.1} parent=1 // pred_region
      %545 = vsyncadd [#allocation4], 0
      %s547 = sshll.u32 [#allocation8], 4
      %s548 = int_to_ptr.vmem [resolvable:$true] %s547
      %s549 = sshll.u32 %s3, 4
      %s550 = int_to_ptr.hbm [resolvable:$true] %s549
      %552 = dma.vmem_to_hbm [thread:$0]  %s548, 128, %s550, [#allocation4]
    $region29: #{tpu_custom_call.1} parent=1 // pred_fallthru
      _
    // Predicated region
    $region30: #{tpu_custom_call.1} parent=1 // pred_check
      _
    $region31: #{tpu_custom_call.1} parent=1 // pred_check_branch
      %554 = sbr.rel (0) target = $region33
    $region32: #{tpu_custom_call.1} parent=1 // pred_region
      %556 = dma.done [#allocation4], 128
    $region33: #{tpu_custom_call.1} parent=1 // pred_fallthru
      _
    %557 = vsyncpa [#allocation3], 1
    %558 = vsyncpa [#allocation6], 1
    %559 = vsyncpa [#allocation4], 1

</llo_original>
